<compile_context>
chip_gen: v7x
topology: tpu7x:2x2x1
jax: 0.10.0
libtpu: 0.0.40
codegen_flags: <defaults>
</compile_context>

<pallas_src>
import functools

import jax
import jax.numpy as jnp
from jax.experimental import pallas as pl
from jax.experimental.pallas import tpu as pltpu

_SUBLANE = 8  # f32 sublane granularity for the second-to-last block dim


def _round_up(x: int, m: int) -> int:
    return (x + m - 1) // m * m


def _linear_kernel(x_ref, w_ref, b_ref, o_ref):
    # x_ref: [tm, D], w_ref: [D, C], b_ref: [1, C], o_ref: [tm, C]
    acc = jnp.dot(x_ref[...], w_ref[...], preferred_element_type=jnp.float32)
    o_ref[...] = (acc + b_ref[...]).astype(o_ref.dtype)


def _choose_tm(batch: int, block_m: int) -> int:
    """Pick the batch tile: a multiple of 8 (or the full extent for tiny
    batches), capped at ceil(batch/2) so the grid has >=2 steps whenever
    possible (keeps both v7x TensorCores busy; harmless on 1-TC v5e/v6e)."""
    if batch <= _SUBLANE:
        return batch  # full-extent block is legal even when < 8
    half = _round_up(pl.cdiv(batch, 2), _SUBLANE)
    return max(_SUBLANE, min(block_m, half))


@functools.partial(jax.jit, static_argnames=("block_m",))
def logistic_regression_forward(x, weight, bias, *, block_m: int = 8192):
    """logits = x @ weight.T + bias via a Pallas TPU kernel.

    Args:
      x:      [batch, input_dim] float32
      weight: [num_classes, input_dim] float32 (PyTorch nn.Linear layout)
      bias:   [num_classes] float32
      block_m: max batch rows per grid step. At 8192, x + out tiles (both
               lane-padded to 128 in VMEM) double-buffered are ~17 MiB.

    Returns:
      logits: [batch, num_classes] float32
    """
    batch, input_dim = x.shape
    num_classes = weight.shape[0]

    tm = _choose_tm(batch, block_m)
    grid = (pl.cdiv(batch, tm),)

    # Tiny wrapper-side reshapes only (no data-sized passes over x):
    # pre-transpose the [C, D] weight and make bias a broadcastable row.
    w_t = weight.T                      # [D, C]
    b2 = bias.reshape(1, num_classes)   # [1, C]

    cost = pl.CostEstimate(
        flops=2 * batch * input_dim * num_classes,
        transcendentals=0,
        bytes_accessed=4 * (batch * input_dim + input_dim * num_classes
                            + batch * num_classes + num_classes),
    )

    return pl.pallas_call(
        _linear_kernel,
        out_shape=jax.ShapeDtypeStruct((batch, num_classes), jnp.float32),
        grid=grid,
        in_specs=[
            # Batch-tiled activations. The last (ragged) tile reads some
            # out-of-bounds garbage rows; safe because rows are independent
            # and OOB output rows are never written back.
            pl.BlockSpec((tm, input_dim), lambda i: (i, 0)),
            # Weight / bias: constant index_map -> resident in VMEM across
            # all grid steps (no re-DMA).
            pl.BlockSpec((input_dim, num_classes), lambda i: (0, 0)),
            pl.BlockSpec((1, num_classes), lambda i: (0, 0)),
        ],
        # Narrow output: last block dim equals the full array extent (legal
        # even though < 128). Masked 2-lane stores are fine — DMA/HBM is the
        # binding resource, and this avoids 64x write inflation + a slice.
        out_specs=pl.BlockSpec((tm, num_classes), lambda i: (i, 0)),
        compiler_params=pltpu.CompilerParams(
            # Independent batch tiles -> megacore shards them on v7x.
            dimension_semantics=("parallel",),
            # Explicit scoped-VMEM budget: ~17 MiB needed at tm=8192; this
            # clears v5e's 16 MiB scoped default and stays under v7x's
            # 64 MiB physical VMEM.
            vmem_limit_bytes=48 * 1024 * 1024,
        ),
        cost_estimate=cost,
    )(x, w_t, b2)


if __name__ == "__main__":
    # Small shapes consistent with the module: combined features of dim 32,
    # binary classification. batch=70 is deliberately not a multiple of the
    # chosen tile so the ragged-last-block path is exercised (tm=40, grid=2).
    batch, input_dim, num_classes = 70, 32, 2

    key = jax.random.PRNGKey(0)
    kx, kw, kb = jax.random.split(key, 3)

    # Deterministic nn.Linear-style init: U(-1/sqrt(in), 1/sqrt(in)).
    bound = 1.0 / (input_dim ** 0.5)
    weight = jax.random.uniform(kw, (num_classes, input_dim),
                                minval=-bound, maxval=bound,
                                dtype=jnp.float32)
    bias = jax.random.uniform(kb, (num_classes,),
                              minval=-bound, maxval=bound,
                              dtype=jnp.float32)
    x = jax.random.normal(kx, (batch, input_dim), dtype=jnp.float32)

    logits = logistic_regression_forward(x, weight, bias)
    logits = jax.block_until_ready(logits)

    # Pure-JAX reference check.
    ref = x @ weight.T + bias
    assert logits.shape == (batch, num_classes)
    assert jnp.allclose(logits, ref, atol=1e-5, rtol=1e-5)

    # Also exercise a smaller tile (tm=16 -> grid of 5, ragged last tile).
    logits2 = jax.block_until_ready(
        logistic_regression_forward(x, weight, bias, block_m=16))
    assert jnp.allclose(logits2, ref, atol=1e-5, rtol=1e-5)

    print("KERNEL_OK")
</pallas_src>

<mosaic_0001>
module attributes {stable_mosaic.version = 11 : i64} {
  func.func @_linear_kernel(%arg0: i32, %arg1: memref<40x32xf32, #tpu.memory_space<vmem>>, %arg2: memref<32x2xf32, #tpu.memory_space<vmem>>, %arg3: memref<1x2xf32, #tpu.memory_space<vmem>>, %arg4: memref<40x2xf32, #tpu.memory_space<vmem>>) attributes {dimension_semantics = [#tpu.dimension_semantics<parallel>], iteration_bounds = array<i64: 2>, scalar_prefetch = 0 : i64, scratch_operands = 0 : i64, tpu.core_type = #tpu.core_type<tc>, window_params = [{transform_indices = @transform_0, window_bounds = array<i64: 40, 32>}, {pipeline_mode = #tpu.pipeline_mode<synchronous>, transform_indices = @transform_1, window_bounds = array<i64: 32, 2>}, {pipeline_mode = #tpu.pipeline_mode<synchronous>, transform_indices = @transform_2, window_bounds = array<i64: 1, 2>}, {transform_indices = @transform_3, window_bounds = array<i64: 40, 2>}]} {
    %c0 = arith.constant 0 : index
    %c0_0 = arith.constant 0 : index
    %0 = vector.load %arg1[%c0, %c0_0] : memref<40x32xf32, #tpu.memory_space<vmem>>, vector<40x32xf32>
    %c0_1 = arith.constant 0 : index
    %c0_2 = arith.constant 0 : index
    %1 = vector.load %arg2[%c0_1, %c0_2] : memref<32x2xf32, #tpu.memory_space<vmem>>, vector<32x2xf32>
    %cst = arith.constant dense<0.000000e+00> : vector<40x2xf32>
    %2 = tpu.matmul %0, %1, %cst {dimension_numbers = #tpu.dot_dimension_numbers<[1], [0], [0], [1], [0, 0, 1, 1], [], []>} : vector<40x32xf32>, vector<32x2xf32>, vector<40x2xf32> -> vector<40x2xf32>
    %c0_3 = arith.constant 0 : index
    %c0_4 = arith.constant 0 : index
    %3 = vector.load %arg3[%c0_3, %c0_4] : memref<1x2xf32, #tpu.memory_space<vmem>>, vector<1x2xf32>
    %4 = vector.broadcast %3 : vector<1x2xf32> to vector<40x2xf32>
    %5 = arith.addf %2, %4 : vector<40x2xf32>
    %c0_5 = arith.constant 0 : index
    %c0_6 = arith.constant 0 : index
    %6 = vector.load %arg4[%c0_5, %c0_6] : memref<40x2xf32, #tpu.memory_space<vmem>>, vector<40x2xf32>
    tpu.vector_store %arg4[%c0_5, %c0_6], %5 {strides = array<i32>} : memref<40x2xf32, #tpu.memory_space<vmem>>, vector<40x2xf32>,
    return
  }
  func.func @transform_0(%arg0: i32) -> (i32, i32) {
    %c0_i32 = arith.constant 0 : i32
    %c0_i32_0 = arith.constant 0 : i32
    return %arg0, %c0_i32 : i32, i32
  }
  func.func @transform_1(%arg0: i32) -> (i32, i32) {
    %c0_i32 = arith.constant 0 : i32
    %c0_i32_0 = arith.constant 0 : i32
    %c0_i32_1 = arith.constant 0 : i32
    return %c0_i32, %c0_i32_0 : i32, i32
  }
  func.func @transform_2(%arg0: i32) -> (i32, i32) {
    %c0_i32 = arith.constant 0 : i32
    %c0_i32_0 = arith.constant 0 : i32
    %c0_i32_1 = arith.constant 0 : i32
    return %c0_i32, %c0_i32_0 : i32, i32
  }
  func.func @transform_3(%arg0: i32) -> (i32, i32) {
    %c0_i32 = arith.constant 0 : i32
    %c0_i32_0 = arith.constant 0 : i32
    return %arg0, %c0_i32 : i32, i32
  }
}

</mosaic_0001>

<llo_original>
// kernel: logistic_regression_forward.1
$region0: #{logistic_regression_forward.1}
  #allocation0 [shape = 'u32[]', space=smem, size = 0x4, offset = 0x4, fixed_abs, tag = 'smem constant byte address 0x4 - core index']
  #allocation1 [shape = 'u32[144,128]{1,0:T(1,128)}', space=vmem, size = 0x12000, scoped, tag = 'internal scratch']
  %s0 = inlined_call_operand.vmem [shape: f32[70,32], index: 0, kind: input, shape index: {}]
  %s1 = inlined_call_operand.vmem [shape: f32[32,2], index: 1, kind: input, shape index: {}]
  %s2 = inlined_call_operand.vmem [shape: f32[1,2], index: 2, kind: input, shape index: {}]
  %s3 = inlined_call_operand.vmem [shape: f32[70,2], index: 3, kind: output, shape index: {}]
  %s4 = sld [smem:[#allocation0]]
  $region93: #{logistic_regression_forward.1} parent=0
    _
  %s6 = ssub.s32 1, %s4
  %s7 = scalar_select 0, %s6, %s4
  $region1: #{logistic_regression_forward.1} parent=0
    #allocation2 [shape = 'u8[40960]{0}', space=vmem, size = 0xa000, scoped, tag = 'output window, operand 0']
    loop: start=0, step=1, limit=4
    $region2: #{logistic_regression_forward.1} parent=1 // loop_pre_header
      _
    $region3: #{logistic_regression_forward.1} parent=1 // loop_header
      %s9 = sphi 0, %s13
      %p10 = scmp.ge.s32.totalorder %s9, 4
      %s19 = sphi 0, %s21
      %s22 = sphi 0, %s19
      %s23 = sphi 0, %s22
      %s39 = sphi 0, %s23
      %s43 = sphi 0, %s43
      %s45 = sphi 0, %s43
      %s46 = sphi 0, %s45
      %s60 = sphi 0, %s46
      %s64 = sphi 0, %s64
      %s66 = sphi 0, %s64
      %s67 = sphi 0, %s66
      %s81 = sphi 0, %s67
      %s87 = sphi 0, %s89
      %s90 = sphi 0, %s87
      %s91 = sphi 0, %s90
      %s107 = sphi 0, %s91
    $region4: #{logistic_regression_forward.1} parent=1 // loop_header_branch
      %12 = sbr.rel (%p10) target = $region8
    $region5: #{logistic_regression_forward.1} parent=1 // loop_body
      %s14 = ssub.s32 %s9, 1
      %s15 = ssub.s32 %s9, 2
      %s16 = sadd.s32 %s9, 1
      %s17 = ssub.s32 %s9, %s16
      %p18 = scmp.eq.s32.totalorder %s17, 0
      %s20 = sadd.s32 %s19, 1
      %s21 = scalar_select %p18, %s19, %s20
      %p24 = pneg %p18
      %p25 = scmp.eq.s32.totalorder %s9, 1
      %p26 = por %p24, %p25
      %p27 = scmp.ne.s32.totalorder %s19, %s22
      %p28 = scmp.eq.s32.totalorder %s9, 0
      %p29 = por %p27, %p28
      %p30 = scmp.ne.s32.totalorder %s19, %s22
      %p31 = scmp.eq.s32.totalorder %s14, 1
      %p32 = por %p30, %p31
      %p33 = scmp.ne.s32.totalorder %s22, %s23
      %p34 = scmp.eq.s32.totalorder %s14, 0
      %p35 = por %p33, %p34
      %p36 = scmp.ne.s32.totalorder %s22, %s23
      %p37 = scmp.eq.s32.totalorder %s15, 1
      %p38 = por %p36, %p37
      %p40 = scmp.ne.s32.totalorder %s23, %s39
      %p41 = scmp.eq.s32.totalorder %s15, 0
      %p42 = por %p40, %p41
      %s44 = sadd.s32 %s43, 1
      %p47 = scmp.eq.s32.totalorder %s9, 1
      %p48 = scmp.ne.s32.totalorder %s43, %s45
      %p49 = scmp.eq.s32.totalorder %s9, 0
      %p50 = por %p48, %p49
      %p51 = scmp.ne.s32.totalorder %s43, %s45
      %p52 = scmp.eq.s32.totalorder %s14, 1
      %p53 = por %p51, %p52
      %p54 = scmp.ne.s32.totalorder %s45, %s46
      %p55 = scmp.eq.s32.totalorder %s14, 0
      %p56 = por %p54, %p55
      %p57 = scmp.ne.s32.totalorder %s45, %s46
      %p58 = scmp.eq.s32.totalorder %s15, 1
      %p59 = por %p57, %p58
      %p61 = scmp.ne.s32.totalorder %s46, %s60
      %p62 = scmp.eq.s32.totalorder %s15, 0
      %p63 = por %p61, %p62
      %s65 = sadd.s32 %s64, 1
      %p68 = scmp.eq.s32.totalorder %s9, 1
      %p69 = scmp.ne.s32.totalorder %s64, %s66
      %p70 = scmp.eq.s32.totalorder %s9, 0
      %p71 = por %p69, %p70
      %p72 = scmp.ne.s32.totalorder %s64, %s66
      %p73 = scmp.eq.s32.totalorder %s14, 1
      %p74 = por %p72, %p73
      %p75 = scmp.ne.s32.totalorder %s66, %s67
      %p76 = scmp.eq.s32.totalorder %s14, 0
      %p77 = por %p75, %p76
      %p78 = scmp.ne.s32.totalorder %s66, %s67
      %p79 = scmp.eq.s32.totalorder %s15, 1
      %p80 = por %p78, %p79
      %p82 = scmp.ne.s32.totalorder %s67, %s81
      %p83 = scmp.eq.s32.totalorder %s15, 0
      %p84 = por %p82, %p83
      %s85 = ssub.s32 %s9, %s16
      %p86 = scmp.eq.s32.totalorder %s85, 0
      %s88 = sadd.s32 %s87, 1
      %s89 = scalar_select %p86, %s87, %s88
      %p92 = pneg %p86
      %p93 = scmp.eq.s32.totalorder %s9, 1
      %p94 = por %p92, %p93
      %p95 = scmp.ne.s32.totalorder %s87, %s90
      %p96 = scmp.eq.s32.totalorder %s9, 0
      %p97 = por %p95, %p96
      %p98 = scmp.ne.s32.totalorder %s87, %s90
      %p99 = scmp.eq.s32.totalorder %s14, 1
      %p100 = por %p98, %p99
      %p101 = scmp.ne.s32.totalorder %s90, %s91
      %p102 = scmp.eq.s32.totalorder %s14, 0
      %p103 = por %p101, %p102
      %p104 = scmp.ne.s32.totalorder %s90, %s91
      %p105 = scmp.eq.s32.totalorder %s15, 1
      %p106 = por %p104, %p105
      %p108 = scmp.ne.s32.totalorder %s91, %s107
      %p109 = scmp.eq.s32.totalorder %s15, 0
      %p110 = por %p108, %p109
      %p111 = scmp.le.s32.totalorder 1, %s9
      %p112 = scmp.lt.s32.totalorder %s9, 3
      %p113 = pnand %p111, %p112
      %p114 = pneg %p113
      // Predicated region
      $region9: #{logistic_regression_forward.1} parent=5 // pred_check
        _
      $region10: #{logistic_regression_forward.1} parent=5 // pred_check_branch
        %116 = sbr.rel (%p113) target = $region12
      $region11: #{logistic_regression_forward.1} parent=5 // pred_region
        %s117 = ssub.s32 %s9, 1
        // Predicated region
        $region13: #{logistic_regression_forward.1} parent=11 // pred_check
          %p118 = pneg %p56
        $region14: #{logistic_regression_forward.1} parent=11 // pred_check_branch
          %120 = sbr.rel (%p118) target = $region16
        $region15: #{logistic_regression_forward.1} parent=11 // pred_region
          _
        $region16: #{logistic_regression_forward.1} parent=11 // pred_fallthru
          _
        // Predicated region
        $region17: #{logistic_regression_forward.1} parent=11 // pred_check
          %p121 = pneg %p77
        $region18: #{logistic_regression_forward.1} parent=11 // pred_check_branch
          %123 = sbr.rel (%p121) target = $region20
        $region19: #{logistic_regression_forward.1} parent=11 // pred_region
          _
        $region20: #{logistic_regression_forward.1} parent=11 // pred_fallthru
          _
      $region12: #{logistic_regression_forward.1} parent=5 // pred_fallthru
        _
      %p124 = scmp.lt.s32.totalorder %s9, 2
      // Predicated region
      $region21: #{logistic_regression_forward.1} parent=5 // pred_check
        %p125 = pneg %p124
      $region22: #{logistic_regression_forward.1} parent=5 // pred_check_branch
        %127 = sbr.rel (%p125) target = $region24
      $region23: #{logistic_regression_forward.1} parent=5 // pred_region
        // Predicated region
        $region25: #{logistic_regression_forward.1} parent=23 // pred_check
          %p128 = pneg %p29
        $region26: #{logistic_regression_forward.1} parent=23 // pred_check_branch
          %130 = sbr.rel (%p128) target = $region28
        $region27: #{logistic_regression_forward.1} parent=23 // pred_region
          %s131 = smul.u32 5, %s9
          %s132 = ssub.s32 9, %s131
          %p133 = scmp.lt.s32.totalorder %s132, 5
          %s134 = scalar_select %p133, %s132, 5
          %s135 = smul.u32 128, %s134
          %p136 = scmp.lt.s32.totalorder %s131, 8
          %s137 = scalar_select %p136, %s131, 8
          %s138 = smul.addr %s137, 8
          %s139 = scalar_lea.vmem %s0, %s138
          %s140 = smul.u32 5, %s9
          %s141 = ssub.s32 9, %s140
          %p142 = scmp.lt.s32.totalorder %s141, 5
          %s143 = scalar_select %p142, %s141, 5
          %s144 = smul.u32 128, %s143
        $region28: #{logistic_regression_forward.1} parent=23 // pred_fallthru
          _
      $region24: #{logistic_regression_forward.1} parent=5 // pred_fallthru
        _
      %p145 = scmp.le.s32.totalorder 1, %s9
      %p146 = scmp.lt.s32.totalorder %s9, 3
      %p147 = pnand %p145, %p146
      %p148 = pneg %p147
      // Predicated region
      $region29: #{logistic_regression_forward.1} parent=5 // pred_check
        _
      $region30: #{logistic_regression_forward.1} parent=5 // pred_check_branch
        %150 = sbr.rel (%p147) target = $region32
      $region31: #{logistic_regression_forward.1} parent=5 // pred_region
        %s151 = ssub.s32 %s9, 1
        %s152 = smul.u32 5, %s14
        %s153 = ssub.s32 9, %s152
        %p154 = scmp.lt.s32.totalorder %s153, 5
        %s155 = scalar_select %p154, %s153, 5
        %s156 = smul.u32 128, %s155
        %p157 = scmp.lt.s32.totalorder %s152, 8
        %s158 = scalar_select %p157, %s152, 8
        %s159 = smul.addr %s158, 8
        %s160 = scalar_lea.vmem %s0, %s159
        %p161 = pneg %p35
        %p162 = pneg %p32
        %p163 = pneg %p56
        %p164 = pneg %p53
        %p165 = pneg %p77
        %p166 = pneg %p74
        %p167 = pneg %p103
        %p168 = pneg %p100
        %s169 = sand.u32 %s90, 1
        %s170 = sand.u32 %s90, 1
        %s171 = smul.addr %s170, 40
        %s172 = scalar_lea.vmem [#allocation2], %s171
        %s173 = smul.u32 5, %s14
        %s174 = ssub.s32 9, %s173
        %p175 = scmp.lt.s32.totalorder %s174, 5
        %s176 = scalar_select %p175, %s174, 5
        %s177 = smul.u32 128, %s176
        %p178 = scmp.lt.s32.totalorder %s173, 8
        %s179 = scalar_select %p178, %s173, 8
        %s180 = smul.addr %s179, 8
        %s181 = scalar_lea.vmem %s0, %s180
        %s182 = smul.u32 5, %s14
        %s183 = ssub.s32 9, %s182
        %p184 = scmp.lt.s32.totalorder %s183, 5
        %s185 = scalar_select %p184, %s183, 5
        %s186 = smul.u32 128, %s185
        %s187 = smul.u32 5, %s14
        %s188 = ssub.s32 9, %s187
        %p189 = scmp.lt.s32.totalorder %s188, 5
        %s190 = scalar_select %p189, %s188, 5
        %s191 = smul.u32 128, %s190
        %v192 = vld [vmem:[%s181] sm:$0xff]
        %v193 = vld [vmem:[%s181 + $0x8] sm:$0xff]
        %v194 = vld [vmem:[%s181 + $0x10] sm:$0xff]
        %v195 = vld [vmem:[%s181 + $0x18] sm:$0xff]
        %v196 = vld [vmem:[%s181 + $0x20] sm:$0xff]
        %v197 = vld [vmem:[%s1] sm:$0xff]
        %v198 = vld [vmem:[%s1 + $0x8] sm:$0xff]
        %v199 = vld [vmem:[%s1 + $0x10] sm:$0xff]
        %v200 = vld [vmem:[%s1 + $0x18] sm:$0xff]
        %v201 = vld [vmem:[%s2] sm:$0x1]
        %v203 = vlaneseq
        %v204 = vshrl.u32 %v203, 7
        %v205 = vsub.s32 0, %v204
        %v206 = vrot.slane %v201, %v205
        %vm208 = vcmask 261120
        %v210 = vsel %vm208, %v192, 0
        %v213 = vsel %vm208, %v193, 0
        %v216 = vsel %vm208, %v194, 0
        %v219 = vsel %vm208, %v195, 0
        %v222 = vsel %vm208, %v196, 0
        %224 = vmatprep.subr.mxu0 0.0
        %225 = vmatpush1.msra.mxu0 %v197
        %226 = vmatprep.subr.mxu0 0.0
        %227 = vmatpush1.msra.mxu0 %v198
        %228 = vmatprep.subr.mxu0 0.0
        %229 = vmatpush1.msra.mxu0 %v199
        %230 = vmatprep.subr.mxu0 0.0
        %231 = vmatpush1.msra.mxu0 %v200
        %232 = vmatprep.subr.mxu0 0.0
        %233 = vmatpush1.msra.mxu0 0.0
        %234 = vmatprep.subr.mxu0 0.0
        %235 = vmatpush1.msra.mxu0 0.0
        %236 = vmatprep.subr.mxu0 0.0
        %237 = vmatpush1.msra.mxu0 0.0
        %238 = vmatprep.subr.mxu0 0.0
        %239 = vmatpush1.msra.mxu0 0.0
        %240 = vmatprep.subr.mxu0 0.0
        %241 = vmatpush1.msra.mxu0 0.0
        %242 = vmatprep.subr.mxu0 0.0
        %243 = vmatpush1.msra.mxu0 0.0
        %244 = vmatprep.subr.mxu0 0.0
        %245 = vmatpush1.msra.mxu0 0.0
        %246 = vmatprep.subr.mxu0 0.0
        %247 = vmatpush1.msra.mxu0 0.0
        %248 = vmatprep.subr.mxu0 0.0
        %249 = vmatpush1.msra.mxu0 0.0
        %250 = vmatprep.subr.mxu0 0.0
        %251 = vmatpush1.msra.mxu0 0.0
        %252 = vmatprep.subr.mxu0 0.0
        %253 = vmatpush1.msra.mxu0 0.0
        %254 = vmatprep.subr.mxu0 0.0
        %255 = vmatpush1.msra.mxu0 0.0
        %256 = vmatprep.subr.mxu0 0.0
        %257 = vmatpush1.msra.mxu0 0.0
        %258 = vmatprep.subr.mxu0 0.0
        %259 = vmatpush1.msra.mxu0 0.0
        %260 = vmatprep.subr.mxu0 0.0
        %261 = vmatpush1.msra.mxu0 0.0
        %262 = vmatprep.subr.mxu0 0.0
        %263 = vmatpush1.msra.mxu0 0.0
        %264 = vmatprep.subr.mxu0 0.0
        %265 = vmatpush1.msra.mxu0 0.0
        %266 = vmatprep.subr.mxu0 0.0
        %267 = vmatpush1.msra.mxu0 0.0
        %268 = vmatprep.subr.mxu0 0.0
        %269 = vmatpush1.msra.mxu0 0.0
        %270 = vmatprep.subr.mxu0 0.0
        %271 = vmatpush1.msra.mxu0 0.0
        %272 = vmatprep.subr.mxu0 0.0
        %273 = vmatpush1.msra.mxu0 0.0
        %274 = vmatprep.subr.mxu0 0.0
        %275 = vmatpush1.msra.mxu0 0.0
        %276 = vmatprep.subr.mxu0 0.0
        %277 = vmatpush1.msra.mxu0 0.0
        %278 = vmatprep.subr.mxu0 0.0
        %279 = vmatpush1.msra.mxu0 0.0
        %280 = vmatprep.subr.mxu0 0.0
        %281 = vmatpush1.msra.mxu0 0.0
        %282 = vmatprep.subr.mxu0 0.0
        %283 = vmatpush1.msra.mxu0 0.0
        %284 = vmatprep.subr.mxu0 0.0
        %285 = vmatpush1.msra.mxu0 0.0
        %286 = vmatprep.subr.mxu0 0.0
        %287 = vmatpush1.msra.mxu0 0.0
        %288 = vmatprep.mubr.f32.mxu0 0.0
        %289 = vmatmul.mubr.f32.gmra.mrb[0].mxu0 %v210
        %v290 = vpop.f32.mrb[0].mxu0
        %v291 = vadd.f32 %v206, %v290
        %v292 = vpop.f32.mrb[0].mxu0
        %293 = vmatprep.mubr.f32.mxu0 0.0
        %294 = vmatmul.mubr.f32.gmra.mrb[0].mxu0 %v213
        %v295 = vpop.f32.mrb[0].mxu0
        %v296 = vadd.f32 %v206, %v295
        %v297 = vpop.f32.mrb[0].mxu0
        %298 = vmatprep.mubr.f32.mxu0 0.0
        %299 = vmatmul.mubr.f32.gmra.mrb[0].mxu0 %v216
        %v300 = vpop.f32.mrb[0].mxu0
        %v301 = vadd.f32 %v206, %v300
        %v302 = vpop.f32.mrb[0].mxu0
        %303 = vmatprep.mubr.f32.mxu0 0.0
        %304 = vmatmul.mubr.f32.gmra.mrb[0].mxu0 %v219
        %v305 = vpop.f32.mrb[0].mxu0
        %v306 = vadd.f32 %v206, %v305
        %v307 = vpop.f32.mrb[0].mxu0
        %308 = vmatprep.mubr.f32.mxu0 0.0
        %309 = vmatmul.mubr.f32.gmra.mrb[0].mxu0 %v222
        %v310 = vpop.f32.mrb[0].mxu0
        %v311 = vadd.f32 %v206, %v310
        %v312 = vpop.f32.mrb[0].mxu0
        %313 = vdwg.mxu0
        %vm314 = vcmask 15360
        %315 = vst.msk [vmem:[%s172] sm:$0xff] %vm314, %v291
        %316 = vst.msk [vmem:[%s172 + $0x8] sm:$0xff] %vm314, %v296
        %317 = vst.msk [vmem:[%s172 + $0x10] sm:$0xff] %vm314, %v301
        %318 = vst.msk [vmem:[%s172 + $0x18] sm:$0xff] %vm314, %v306
        %319 = vst.msk [vmem:[%s172 + $0x20] sm:$0xff] %vm314, %v311
        %s320 = sand.u32 %s90, 1
        %s321 = sand.u32 %s90, 1
        %s322 = smul.addr %s321, 40
        %s323 = scalar_lea.vmem [#allocation2], %s322
        // Predicated region
        $region33: #{logistic_regression_forward.1} parent=31 // pred_check
          %p324 = pneg %p100
        $region34: #{logistic_regression_forward.1} parent=31 // pred_check_branch
          %326 = sbr.rel (%p324) target = $region36
        $region35: #{logistic_regression_forward.1} parent=31 // pred_region
          %s327 = smul.u32 5, %s14
          %s328 = ssub.s32 9, %s327
          %p329 = scmp.lt.s32.totalorder %s328, 5
          %s330 = scalar_select %p329, %s328, 5
          %s331 = smul.u32 128, %s330
          %p332 = scmp.ne.s32.totalorder 0, %s331
          %s333 = smul.addr %s327, 8
          %s334 = scalar_lea.vmem %s3, %s333
          // Predicated region
          $region37: #{logistic_regression_forward.1} parent=35 // pred_check
            %p335 = pneg %p332
          $region38: #{logistic_regression_forward.1} parent=35 // pred_check_branch
            %337 = sbr.rel (%p335) target = $region40
          $region39: #{logistic_regression_forward.1} parent=35 // pred_region
            // Predicated region
            $region41: #{logistic_regression_forward.1} parent=39 // pred_check
              _
            $region42: #{logistic_regression_forward.1} parent=39 // pred_check_branch
              %339 = sbr.rel (0) target = $region44
            $region43: #{logistic_regression_forward.1} parent=39 // pred_region
              // Predicated region
              $region63: #{logistic_regression_forward.1} parent=43 // pred_check
                _
              $region64: #{logistic_regression_forward.1} parent=43 // pred_check_branch
                %397 = sbr.rel (0) target = $region66
              $region65: #{logistic_regression_forward.1} parent=43 // pred_region
                %s398 = sdiv.u32.pop %s330, 5
                %s399 = srem.u32.pop %s330, 5
                // While loop
                $region67: #{logistic_regression_forward.1} parent=65 // loop_pre_header
                  _
                $region68: #{logistic_regression_forward.1} parent=65 // loop_header
                  %s401 = sphi 0, %s403
                  %p402 = scmp.ge.s32.totalorder %s401, %s398
                  %s406 = sphi 0, %s421
                  %s407 = sphi %s323, %s424
                  %s408 = sphi %s334, %s425
                $region69: #{logistic_regression_forward.1} parent=65 // loop_header_branch
                  %405 = sbr.rel (%p402) target = $region73
                $region70: #{logistic_regression_forward.1} parent=65 // loop_body
                  %v409 = vld [vmem:[%s407] sm:$0xff]
                  %410 = vst [vmem:[%s408] sm:$0xff] %v409
                  %v411 = vld [vmem:[%s407 + $0x8] sm:$0xff]
                  %412 = vst [vmem:[%s408 + $0x8] sm:$0xff] %v411
                  %v413 = vld [vmem:[%s407 + $0x10] sm:$0xff]
                  %414 = vst [vmem:[%s408 + $0x10] sm:$0xff] %v413
                  %v415 = vld [vmem:[%s407 + $0x18] sm:$0xff]
                  %416 = vst [vmem:[%s408 + $0x18] sm:$0xff] %v415
                  %v417 = vld [vmem:[%s407 + $0x20] sm:$0xff]
                  %418 = vst [vmem:[%s408 + $0x20] sm:$0xff] %v417
                  %s419 = sadd.s32 1, %s406
                  %p420 = scmp.ge.s32.totalorder %s419, %s398
                  %s421 = scalar_select %p420, 0, %s419
                  %s422 = smul.u32 %s421, 40
                  %s423 = smul.u32 %s421, 40
                  %s424 = scalar_lea.vmem %s323, %s422 [#allocation2]
                  %s425 = scalar_lea.vmem %s334, %s423
                $region71: #{logistic_regression_forward.1} parent=65 // loop_footer
                  %s403 = sadd.s32 %s401, 1
                $region72: #{logistic_regression_forward.1} parent=65 // loop_footer_branch
                  %400 = sbr.rel target = $region68
                $region73: #{logistic_regression_forward.1} parent=65 // loop_exit
                  _
                %s426 = sdiv.u32.pop %s330, 5
                %s427 = srem.u32.pop %s330, 5
                %s428 = smul.u32 %s426, 5
                %s429 = smul.u32 8, %s428
                %s430 = scalar_lea.vmem %s323, %s429 [#allocation2]
                %s431 = smul.u32 8, %s428
                %s432 = scalar_lea.vmem %s334, %s431
                // While loop
                $region74: #{logistic_regression_forward.1} parent=65 // loop_pre_header
                  _
                $region75: #{logistic_regression_forward.1} parent=65 // loop_header
                  %s434 = sphi 0, %s436
                  %p435 = scmp.ge.s32.totalorder %s434, %s427
                  %s439 = sphi 0, %s446
                  %s440 = sphi %s430, %s449
                  %s441 = sphi %s432, %s450
                $region76: #{logistic_regression_forward.1} parent=65 // loop_header_branch
                  %438 = sbr.rel (%p435) target = $region80
                $region77: #{logistic_regression_forward.1} parent=65 // loop_body
                  %v442 = vld [vmem:[%s440] sm:$0xff]
                  %443 = vst [vmem:[%s441] sm:$0xff] %v442
                  %s444 = sadd.s32 1, %s439
                  %p445 = scmp.ge.s32.totalorder %s444, %s427
                  %s446 = scalar_select %p445, 0, %s444
                  %s447 = smul.u32 %s446, 8
                  %s448 = smul.u32 %s446, 8
                  %s449 = scalar_lea.vmem %s430, %s447 [#allocation2]
                  %s450 = scalar_lea.vmem %s432, %s448
                $region78: #{logistic_regression_forward.1} parent=65 // loop_footer
                  %s436 = sadd.s32 %s434, 1
                $region79: #{logistic_regression_forward.1} parent=65 // loop_footer_branch
                  %433 = sbr.rel target = $region75
                $region80: #{logistic_regression_forward.1} parent=65 // loop_exit
                  _
              $region66: #{logistic_regression_forward.1} parent=43 // pred_fallthru
                _
              // Predicated region
              $region81: #{logistic_regression_forward.1} parent=43 // pred_check
                _
              $region82: #{logistic_regression_forward.1} parent=43 // pred_check_branch
                %452 = sbr.rel target = $region84
              $region83: #{logistic_regression_forward.1} parent=43 // pred_region
                _
              $region84: #{logistic_regression_forward.1} parent=43 // pred_fallthru
                _
            $region44: #{logistic_regression_forward.1} parent=39 // pred_fallthru
              _
            // Predicated region
            $region45: #{logistic_regression_forward.1} parent=39 // pred_check
              _
            $region46: #{logistic_regression_forward.1} parent=39 // pred_check_branch
              %341 = sbr.rel target = $region48
            $region47: #{logistic_regression_forward.1} parent=39 // pred_region
              %s343 = sdiv.u32.pop %s330, 5
              %s344 = srem.u32.pop %s330, 5
              // While loop
              $region49: #{logistic_regression_forward.1} parent=47 // loop_pre_header
                _
              $region50: #{logistic_regression_forward.1} parent=47 // loop_header
                %s346 = sphi 0, %s348
                %p347 = scmp.ge.s32.totalorder %s346, %s343
                %s351 = sphi 0, %s366
                %s352 = sphi %s323, %s369
                %s353 = sphi %s334, %s370
              $region51: #{logistic_regression_forward.1} parent=47 // loop_header_branch
                %350 = sbr.rel (%p347) target = $region55
              $region52: #{logistic_regression_forward.1} parent=47 // loop_body
                %v354 = vld [vmem:[%s352] sm:$0xff]
                %355 = vst [vmem:[%s353] sm:$0xff] %v354
                %v356 = vld [vmem:[%s352 + $0x8] sm:$0xff]
                %357 = vst [vmem:[%s353 + $0x8] sm:$0xff] %v356
                %v358 = vld [vmem:[%s352 + $0x10] sm:$0xff]
                %359 = vst [vmem:[%s353 + $0x10] sm:$0xff] %v358
                %v360 = vld [vmem:[%s352 + $0x18] sm:$0xff]
                %361 = vst [vmem:[%s353 + $0x18] sm:$0xff] %v360
                %v362 = vld [vmem:[%s352 + $0x20] sm:$0xff]
                %363 = vst [vmem:[%s353 + $0x20] sm:$0xff] %v362
                %s364 = sadd.s32 1, %s351
                %p365 = scmp.ge.s32.totalorder %s364, %s343
                %s366 = scalar_select %p365, 0, %s364
                %s367 = smul.u32 %s366, 40
                %s368 = smul.u32 %s366, 40
                %s369 = scalar_lea.vmem %s323, %s367 [#allocation2]
                %s370 = scalar_lea.vmem %s334, %s368
              $region53: #{logistic_regression_forward.1} parent=47 // loop_footer
                %s348 = sadd.s32 %s346, 1
              $region54: #{logistic_regression_forward.1} parent=47 // loop_footer_branch
                %345 = sbr.rel target = $region50
              $region55: #{logistic_regression_forward.1} parent=47 // loop_exit
                _
              %s371 = sdiv.u32.pop %s330, 5
              %s372 = srem.u32.pop %s330, 5
              %s373 = smul.u32 %s371, 5
              %s374 = smul.u32 8, %s373
              %s375 = scalar_lea.vmem %s323, %s374 [#allocation2]
              %s376 = smul.u32 8, %s373
              %s377 = scalar_lea.vmem %s334, %s376
              // While loop
              $region56: #{logistic_regression_forward.1} parent=47 // loop_pre_header
                _
              $region57: #{logistic_regression_forward.1} parent=47 // loop_header
                %s379 = sphi 0, %s381
                %p380 = scmp.ge.s32.totalorder %s379, %s372
                %s384 = sphi 0, %s391
                %s385 = sphi %s375, %s394
                %s386 = sphi %s377, %s395
              $region58: #{logistic_regression_forward.1} parent=47 // loop_header_branch
                %383 = sbr.rel (%p380) target = $region62
              $region59: #{logistic_regression_forward.1} parent=47 // loop_body
                %v387 = vld [vmem:[%s385] sm:$0xff]
                %388 = vst [vmem:[%s386] sm:$0xff] %v387
                %s389 = sadd.s32 1, %s384
                %p390 = scmp.ge.s32.totalorder %s389, %s372
                %s391 = scalar_select %p390, 0, %s389
                %s392 = smul.u32 %s391, 8
                %s393 = smul.u32 %s391, 8
                %s394 = scalar_lea.vmem %s375, %s392 [#allocation2]
                %s395 = scalar_lea.vmem %s377, %s393
              $region60: #{logistic_regression_forward.1} parent=47 // loop_footer
                %s381 = sadd.s32 %s379, 1
              $region61: #{logistic_regression_forward.1} parent=47 // loop_footer_branch
                %378 = sbr.rel target = $region57
              $region62: #{logistic_regression_forward.1} parent=47 // loop_exit
                _
            $region48: #{logistic_regression_forward.1} parent=39 // pred_fallthru
              _
          $region40: #{logistic_regression_forward.1} parent=35 // pred_fallthru
            _
          %453 = vnop
        $region36: #{logistic_regression_forward.1} parent=31 // pred_fallthru
          _
      $region32: #{logistic_regression_forward.1} parent=5 // pred_fallthru
        _
      %p454 = scmp.le.s32.totalorder 2, %s9
      // Predicated region
      $region85: #{logistic_regression_forward.1} parent=5 // pred_check
        %p455 = pneg %p454
      $region86: #{logistic_regression_forward.1} parent=5 // pred_check_branch
        %457 = sbr.rel (%p455) target = $region88
      $region87: #{logistic_regression_forward.1} parent=5 // pred_region
        %s458 = ssub.s32 %s9, 2
        // Predicated region
        $region89: #{logistic_regression_forward.1} parent=87 // pred_check
          %p459 = pneg %p106
        $region90: #{logistic_regression_forward.1} parent=87 // pred_check_branch
          %461 = sbr.rel (%p459) target = $region92
        $region91: #{logistic_regression_forward.1} parent=87 // pred_region
          %s462 = sand.u32 %s91, 1
          %s463 = sand.u32 %s91, 1
          %s464 = smul.addr %s463, 40
          %s465 = scalar_lea.vmem [#allocation2], %s464
        $region92: #{logistic_regression_forward.1} parent=87 // pred_fallthru
          _
      $region88: #{logistic_regression_forward.1} parent=5 // pred_fallthru
        _
    $region6: #{logistic_regression_forward.1} parent=1 // loop_footer
      %s13 = sadd.s32 1, %s9
    $region7: #{logistic_regression_forward.1} parent=1 // loop_footer_branch
      %8 = sbr.rel target = $region3
    $region8: #{logistic_regression_forward.1} parent=1 // loop_exit
      _

</llo_original>
